<compile_context>
chip_gen: v7x
topology: tpu7x:2x2x1
jax: 0.10.0
libtpu: 0.0.40
codegen_flags: <defaults>
</compile_context>

<pallas_src>
import functools

import jax
import jax.numpy as jnp
from jax import lax
from jax.experimental import pallas as pl
from jax.experimental.pallas import tpu as pltpu


def _alignseg_kernel(seg_ref, f_ref, o_ref, *, tile_n, n_valid, inv_n):
    i = pl.program_id(0)

    seg = seg_ref[...].astype(jnp.float32)          # (tile_n, D)
    f = f_ref[...].astype(jnp.float32)              # (M, D)

    eps = 1e-12  # F.normalize default eps; clamp applied on the sum of squares
    seg_ss = jnp.maximum(jnp.sum(seg * seg, axis=1, keepdims=True), eps * eps)
    f_ss = jnp.maximum(jnp.sum(f * f, axis=1, keepdims=True), eps * eps)
    seg_n = seg * lax.rsqrt(seg_ss)                 # rsqrt -> EUP, mul -> VPU
    f_n = f * lax.rsqrt(f_ss)

    # Cosine similarities: contract the last (lane) dim of both operands so the
    # MXU consumes them directly (no XLU transpose / VMEM re-layout of f_n).
    ab = lax.dot_general(
        seg_n, f_n,
        dimension_numbers=(((1,), (1,)), ((), ())),
        preferred_element_type=jnp.float32)         # (tile_n, M)

    # Rows are exactly unit-norm -> ||a - b||^2 == 2 - 2<a, b>.
    dist = jnp.sqrt(jnp.maximum(2.0 - 2.0 * ab, 0.0))
    sim = 1.0 / (dist + 1.0)
    cost = 1.0 - sim

    # Fused softmax (T = 1) + loss reduction.  sim is bounded in (0, 1], so exp
    # cannot overflow and no row-max subtraction is needed; t_dist is never
    # materialized (saves one (tile_n, M) temporary and one XLU reduction).
    e = jnp.exp(sim)
    num = jnp.sum(cost * e, axis=1, keepdims=True)  # (tile_n, 1)
    den = jnp.sum(e, axis=1, keepdims=True)         # (tile_n, 1)
    # NOTE: pl.reciprocal(den, approx=True) would route this through the EUP
    # slot; exact divide kept to stay well inside the fp32 reference tolerance.
    row = num / den

    # Zero contributions from rows that only exist because N was padded up to a
    # multiple of tile_n.
    gidx = i * tile_n + lax.broadcasted_iota(jnp.int32, (tile_n, 1), 0)
    row = jnp.where(gidx < n_valid, row, 0.0)

    partial = jnp.sum(row) * inv_n                  # pro = uniform 1/N weight
    # Lane-dense (1, 1, 128) partial slab -> unmasked vector store.
    o_ref[...] = jnp.broadcast_to(partial, o_ref.shape).astype(jnp.float32)


def _round_up(x, m):
    return (x + m - 1) // m * m


def align_seg_loss(segment_feat, f_feat, *, tile_n=128):
    """AlignSeg forward loss (scalar) via a Pallas TPU kernel, tiled over N."""
    # TODO(synk): for tiny problems (N*M < ~10k) the pure-JAX reference below is
    # the faster dispatch; kernel launch + DMA dominates at those sizes.
    N, D = segment_feat.shape
    M, D2 = f_feat.shape
    assert D == D2, "feature dims must match"

    # Tile over the segment rows; the softmax axis (M) stays whole per tile so
    # no online softmax is required.
    tile_n = min(tile_n, _round_up(N, 8))           # sublane-aligned tile
    n_pad = _round_up(N, tile_n)
    if n_pad != N:
        segment_feat = jnp.pad(segment_feat, ((0, n_pad - N), (0, 0)))
    num_tiles = n_pad // tile_n

    kernel = functools.partial(
        _alignseg_kernel, tile_n=tile_n, n_valid=N, inv_n=1.0 / N)

    partials = pl.pallas_call(
        kernel,
        out_shape=jax.ShapeDtypeStruct((num_tiles, 1, 128), jnp.float32),
        grid=(num_tiles,),
        in_specs=[
            pl.BlockSpec((tile_n, D), lambda i: (i, 0)),   # seg tile, double-buffered
            pl.BlockSpec((M, D), lambda i: (0, 0)),        # f resident across tiles
        ],
        out_specs=pl.BlockSpec((1, 1, 128), lambda i: (i, 0, 0)),
        compiler_params=pltpu.CompilerParams(
            dimension_semantics=("parallel",),             # tiles are independent
        ),
    )(segment_feat, f_feat)

    # Each tile's partial sum is replicated across its 128 lanes; reduce here.
    return jnp.sum(partials[:, 0, 0])


def align_seg_loss_ref(segment_feat, f_feat):
    """Pure-JAX reference mirroring the PyTorch module."""
    eps = 1e-12
    seg = segment_feat / jnp.maximum(
        jnp.linalg.norm(segment_feat, axis=1, keepdims=True), eps)
    f = f_feat / jnp.maximum(
        jnp.linalg.norm(f_feat, axis=1, keepdims=True), eps)
    d2 = jnp.maximum(
        jnp.sum(seg * seg, 1)[:, None] + jnp.sum(f * f, 1)[None, :]
        - 2.0 * seg @ f.T, 0.0)
    dist = jnp.sqrt(d2)
    sim = 1.0 / (dist + 1.0)
    cost = 1.0 - sim
    t_dist = jax.nn.softmax(sim, axis=1)
    n = segment_feat.shape[0]
    return jnp.sum(jnp.sum(cost * t_dist, axis=1) * (1.0 / n))


if __name__ == "__main__":
    key = jax.random.PRNGKey(0)
    k1, k2 = jax.random.split(key)
    # (num_segments, feat_dim), (num_frames, feat_dim).  N = 20 with tile_n = 8
    # exercises multi-tile execution plus the padded-row mask path.
    segment_feat = jax.random.normal(k1, (20, 32), dtype=jnp.float32)
    f_feat = jax.random.normal(k2, (16, 32), dtype=jnp.float32)

    loss = align_seg_loss(segment_feat, f_feat, tile_n=8)
    jax.block_until_ready(loss)

    ref = align_seg_loss_ref(segment_feat, f_feat)
    assert jnp.allclose(loss, ref, atol=1e-5, rtol=1e-5), (loss, ref)

    print("KERNEL_OK")
</pallas_src>

<mosaic_0001>
module attributes {stable_mosaic.version = 11 : i64} {
  func.func @_alignseg_kernel(%arg0: i32, %arg1: memref<8x32xf32, #tpu.memory_space<vmem>>, %arg2: memref<16x32xf32, #tpu.memory_space<vmem>>, %arg3: memref<1x1x128xf32, #tpu.memory_space<vmem>>) attributes {dimension_semantics = [#tpu.dimension_semantics<parallel>], iteration_bounds = array<i64: 3>, scalar_prefetch = 0 : i64, scratch_operands = 0 : i64, tpu.core_type = #tpu.core_type<tc>, window_params = [{transform_indices = @transform_0, window_bounds = array<i64: 8, 32>}, {pipeline_mode = #tpu.pipeline_mode<synchronous>, transform_indices = @transform_1, window_bounds = array<i64: 16, 32>}, {transform_indices = @transform_2, window_bounds = array<i64: 1, 1, 128>}]} {
    %c0 = arith.constant 0 : index
    %c0_0 = arith.constant 0 : index
    %0 = vector.load %arg1[%c0, %c0_0] : memref<8x32xf32, #tpu.memory_space<vmem>>, vector<8x32xf32>
    %c0_1 = arith.constant 0 : index
    %c0_2 = arith.constant 0 : index
    %1 = vector.load %arg2[%c0_1, %c0_2] : memref<16x32xf32, #tpu.memory_space<vmem>>, vector<16x32xf32>
    %2 = arith.mulf %0, %0 : vector<8x32xf32>
    %cst = arith.constant dense<0.000000e+00> : vector<8xf32>
    %3 = vector.multi_reduction <add>, %2, %cst [1] : vector<8x32xf32> to vector<8xf32>
    %4 = vector.shape_cast %3 : vector<8xf32> to vector<8x1xf32>
    %cst_3 = arith.constant 1.000000e-24 : f32
    %5 = vector.broadcast %cst_3 : f32 to vector<8x1xf32>
    %6 = arith.maximumf %4, %5 : vector<8x1xf32>
    %7 = arith.mulf %1, %1 : vector<16x32xf32>
    %cst_4 = arith.constant dense<0.000000e+00> : vector<16xf32>
    %8 = vector.multi_reduction <add>, %7, %cst_4 [1] : vector<16x32xf32> to vector<16xf32>
    %9 = vector.shape_cast %8 : vector<16xf32> to vector<16x1xf32>
    %cst_5 = arith.constant 1.000000e-24 : f32
    %10 = vector.broadcast %cst_5 : f32 to vector<16x1xf32>
    %11 = arith.maximumf %9, %10 : vector<16x1xf32>
    %12 = math.rsqrt %6 : vector<8x1xf32>
    %13 = vector.broadcast %12 : vector<8x1xf32> to vector<8x32xf32>
    %14 = arith.mulf %0, %13 : vector<8x32xf32>
    %15 = math.rsqrt %11 : vector<16x1xf32>
    %16 = vector.broadcast %15 : vector<16x1xf32> to vector<16x32xf32>
    %17 = arith.mulf %1, %16 : vector<16x32xf32>
    %cst_6 = arith.constant dense<0.000000e+00> : vector<8x16xf32>
    %18 = tpu.matmul %14, %17, %cst_6 {dimension_numbers = #tpu.dot_dimension_numbers<[1], [1], [0], [0], [0, 0, 1, 0], [], []>} : vector<8x32xf32>, vector<16x32xf32>, vector<8x16xf32> -> vector<8x16xf32>
    %cst_7 = arith.constant 2.000000e+00 : f32
    %19 = vector.broadcast %cst_7 : f32 to vector<8x16xf32>
    %20 = arith.mulf %19, %18 : vector<8x16xf32>
    %cst_8 = arith.constant 2.000000e+00 : f32
    %21 = vector.broadcast %cst_8 : f32 to vector<8x16xf32>
    %22 = arith.subf %21, %20 : vector<8x16xf32>
    %cst_9 = arith.constant 0.000000e+00 : f32
    %23 = vector.broadcast %cst_9 : f32 to vector<8x16xf32>
    %24 = arith.maximumf %22, %23 : vector<8x16xf32>
    %25 = math.sqrt %24 : vector<8x16xf32>
    %cst_10 = arith.constant 1.000000e+00 : f32
    %26 = vector.broadcast %cst_10 : f32 to vector<8x16xf32>
    %27 = arith.addf %25, %26 : vector<8x16xf32>
    %cst_11 = arith.constant 1.000000e+00 : f32
    %28 = vector.broadcast %cst_11 : f32 to vector<8x16xf32>
    %29 = arith.divf %28, %27 : vector<8x16xf32>
    %cst_12 = arith.constant 1.000000e+00 : f32
    %30 = vector.broadcast %cst_12 : f32 to vector<8x16xf32>
    %31 = arith.subf %30, %29 : vector<8x16xf32>
    %32 = math.exp %29 : vector<8x16xf32>
    %33 = arith.mulf %31, %32 : vector<8x16xf32>
    %cst_13 = arith.constant dense<0.000000e+00> : vector<8xf32>
    %34 = vector.multi_reduction <add>, %33, %cst_13 [1] : vector<8x16xf32> to vector<8xf32>
    %35 = vector.shape_cast %34 : vector<8xf32> to vector<8x1xf32>
    %cst_14 = arith.constant dense<0.000000e+00> : vector<8xf32>
    %36 = vector.multi_reduction <add>, %32, %cst_14 [1] : vector<8x16xf32> to vector<8xf32>
    %37 = vector.shape_cast %36 : vector<8xf32> to vector<8x1xf32>
    %38 = arith.divf %35, %37 : vector<8x1xf32>
    %c8_i32 = arith.constant 8 : i32
    %39 = arith.muli %arg0, %c8_i32 : i32
    %40 = tpu.iota {dimensions = array<i32: 0>} : vector<8x1xi32>
    %41 = vector.broadcast %39 : i32 to vector<8x1xi32>
    %42 = arith.addi %41, %40 : vector<8x1xi32>
    %c20_i32 = arith.constant 20 : i32
    %43 = vector.broadcast %c20_i32 : i32 to vector<8x1xi32>
    %44 = arith.cmpi slt, %42, %43 : vector<8x1xi32>
    %cst_15 = arith.constant 0.000000e+00 : f32
    %45 = vector.broadcast %cst_15 : f32 to vector<8x1xf32>
    %46 = arith.select %44, %38, %45 : vector<8x1xi1>, vector<8x1xf32>
    %47 = vector.shape_cast %46 : vector<8x1xf32> to vector<1x8x1xf32>
    %cst_16 = arith.constant dense<0.000000e+00> : vector<1xf32>
    %48 = vector.multi_reduction <add>, %47, %cst_16 [1, 2] : vector<1x8x1xf32> to vector<1xf32>
    %49 = vector.shape_cast %48 : vector<1xf32> to vector<1x1x1xf32>
    %50 = vector.extract %49[0, 0, 0] : f32 from vector<1x1x1xf32>
    %cst_17 = arith.constant 5.000000e-02 : f32
    %51 = arith.mulf %50, %cst_17 : f32
    %52 = vector.broadcast %51 : f32 to vector<1x1x128xf32>
    %c0_18 = arith.constant 0 : index
    %c0_19 = arith.constant 0 : index
    %c0_20 = arith.constant 0 : index
    %53 = vector.load %arg3[%c0_18, %c0_19, %c0_20] : memref<1x1x128xf32, #tpu.memory_space<vmem>>, vector<1x1x128xf32>
    tpu.vector_store %arg3[%c0_18, %c0_19, %c0_20], %52 {strides = array<i32>} : memref<1x1x128xf32, #tpu.memory_space<vmem>>, vector<1x1x128xf32>,
    return
  }
  func.func @transform_0(%arg0: i32) -> (i32, i32) {
    %c0_i32 = arith.constant 0 : i32
    %c0_i32_0 = arith.constant 0 : i32
    return %arg0, %c0_i32 : i32, i32
  }
  func.func @transform_1(%arg0: i32) -> (i32, i32) {
    %c0_i32 = arith.constant 0 : i32
    %c0_i32_0 = arith.constant 0 : i32
    %c0_i32_1 = arith.constant 0 : i32
    return %c0_i32, %c0_i32_0 : i32, i32
  }
  func.func @transform_2(%arg0: i32) -> (i32, i32, i32) {
    %c0_i32 = arith.constant 0 : i32
    %c0_i32_0 = arith.constant 0 : i32
    %c0_i32_1 = arith.constant 0 : i32
    return %arg0, %c0_i32, %c0_i32_0 : i32, i32, i32
  }
}

</mosaic_0001>

<llo_original>
// kernel: tpu_custom_call.1
$region0: #{tpu_custom_call.1}
  #allocation0 [shape = 'u32[]', space=smem, size = 0x4, offset = 0x4, fixed_abs, tag = 'smem constant byte address 0x4 - core index']
  #allocation1 [shape = 'u32[144,128]{1,0:T(1,128)}', space=vmem, size = 0x12000, scoped, tag = 'internal scratch']
  %s0 = inlined_call_operand.hbm [shape: f32[24,32], index: 0, kind: input, shape index: {}]
  %s1 = inlined_call_operand.hbm [shape: f32[16,32], index: 1, kind: input, shape index: {}]
  %s2 = inlined_call_operand.hbm [shape: f32[3,1,128], index: 2, kind: output, shape index: {}]
  %s3 = sld [smem:[#allocation0]]
  $region49: #{tpu_custom_call.1} parent=0
    _
  %s5 = ssub.s32 1, %s3
  %s6 = scalar_select 0, %s5, %s3
  $region1: #{tpu_custom_call.1} parent=0
    #allocation2 [shape = 'u8[8192]{0}', space=vmem, size = 0x2000, scoped, tag = 'input window, operand 0']
    #allocation3 [shape = 's32[2]{0}', space=sflag, size = 0x8, scoped, tag = 'scoped memory for tpu_custom_call.1']
    #allocation4 [shape = 's32[2]{0}', space=sflag, size = 0x8, scoped, tag = 'scoped memory for tpu_custom_call.1']
    #allocation5 [shape = 'u8[8192]{0}', space=vmem, size = 0x2000, scoped, tag = 'input window, operand 1, single buffered']
    #allocation6 [shape = 's32[1]{0}', space=sflag, size = 0x4, scoped, tag = 'scoped memory for tpu_custom_call.1']
    #allocation7 [shape = 'u8[1024]{0}', space=vmem, size = 0x400, scoped, tag = 'output window, operand 0']
    %7 = vsyncpa [#allocation3], 0
    %s8 = scalar_lea.sflag [#allocation3], 1
    %9 = vsyncpa %s8, 0
    %10 = vsyncpa [#allocation6], 0
    %11 = vsyncpa [#allocation4], 0
    %s12 = scalar_lea.sflag [#allocation4], 1
    %13 = vsyncpa %s12, 0
    loop: start=0, step=1, limit=5
    $region2: #{tpu_custom_call.1} parent=1 // loop_pre_header
      _
    $region3: #{tpu_custom_call.1} parent=1 // loop_header
      %s15 = sphi 0, %s19
      %p16 = scmp.ge.s32.totalorder %s15, 5
      %s25 = sphi 0, %s27
      %s28 = sphi 0, %s25
      %s29 = sphi 0, %s28
      %s45 = sphi 0, %s29
      %s49 = sphi 0, %s49
      %s51 = sphi 0, %s49
      %s52 = sphi 0, %s51
      %s66 = sphi 0, %s52
      %s72 = sphi 0, %s74
      %s75 = sphi 0, %s72
      %s76 = sphi 0, %s75
      %s92 = sphi 0, %s76
    $region4: #{tpu_custom_call.1} parent=1 // loop_header_branch
      %18 = sbr.rel (%p16) target = $region8
    $region5: #{tpu_custom_call.1} parent=1 // loop_body
      %s20 = ssub.s32 %s15, 1
      %s21 = ssub.s32 %s15, 2
      %s22 = sadd.s32 %s15, 1
      %s23 = ssub.s32 %s15, %s22
      %p24 = scmp.eq.s32.totalorder %s23, 0
      %s26 = sadd.s32 %s25, 1
      %s27 = scalar_select %p24, %s25, %s26
      %p30 = pneg %p24
      %p31 = scmp.eq.s32.totalorder %s15, 2
      %p32 = por %p30, %p31
      %p33 = scmp.ne.s32.totalorder %s25, %s28
      %p34 = scmp.eq.s32.totalorder %s15, 0
      %p35 = por %p33, %p34
      %p36 = scmp.ne.s32.totalorder %s25, %s28
      %p37 = scmp.eq.s32.totalorder %s20, 2
      %p38 = por %p36, %p37
      %p39 = scmp.ne.s32.totalorder %s28, %s29
      %p40 = scmp.eq.s32.totalorder %s20, 0
      %p41 = por %p39, %p40
      %p42 = scmp.ne.s32.totalorder %s28, %s29
      %p43 = scmp.eq.s32.totalorder %s21, 2
      %p44 = por %p42, %p43
      %p46 = scmp.ne.s32.totalorder %s29, %s45
      %p47 = scmp.eq.s32.totalorder %s21, 0
      %p48 = por %p46, %p47
      %s50 = sadd.s32 %s49, 1
      %p53 = scmp.eq.s32.totalorder %s15, 2
      %p54 = scmp.ne.s32.totalorder %s49, %s51
      %p55 = scmp.eq.s32.totalorder %s15, 0
      %p56 = por %p54, %p55
      %p57 = scmp.ne.s32.totalorder %s49, %s51
      %p58 = scmp.eq.s32.totalorder %s20, 2
      %p59 = por %p57, %p58
      %p60 = scmp.ne.s32.totalorder %s51, %s52
      %p61 = scmp.eq.s32.totalorder %s20, 0
      %p62 = por %p60, %p61
      %p63 = scmp.ne.s32.totalorder %s51, %s52
      %p64 = scmp.eq.s32.totalorder %s21, 2
      %p65 = por %p63, %p64
      %p67 = scmp.ne.s32.totalorder %s52, %s66
      %p68 = scmp.eq.s32.totalorder %s21, 0
      %p69 = por %p67, %p68
      %s70 = ssub.s32 %s15, %s22
      %p71 = scmp.eq.s32.totalorder %s70, 0
      %s73 = sadd.s32 %s72, 1
      %s74 = scalar_select %p71, %s72, %s73
      %p77 = pneg %p71
      %p78 = scmp.eq.s32.totalorder %s15, 2
      %p79 = por %p77, %p78
      %p80 = scmp.ne.s32.totalorder %s72, %s75
      %p81 = scmp.eq.s32.totalorder %s15, 0
      %p82 = por %p80, %p81
      %p83 = scmp.ne.s32.totalorder %s72, %s75
      %p84 = scmp.eq.s32.totalorder %s20, 2
      %p85 = por %p83, %p84
      %p86 = scmp.ne.s32.totalorder %s75, %s76
      %p87 = scmp.eq.s32.totalorder %s20, 0
      %p88 = por %p86, %p87
      %p89 = scmp.ne.s32.totalorder %s75, %s76
      %p90 = scmp.eq.s32.totalorder %s21, 2
      %p91 = por %p89, %p90
      %p93 = scmp.ne.s32.totalorder %s76, %s92
      %p94 = scmp.eq.s32.totalorder %s21, 0
      %p95 = por %p93, %p94
      %p96 = scmp.le.s32.totalorder 1, %s15
      %p97 = scmp.lt.s32.totalorder %s15, 4
      %p98 = pnand %p96, %p97
      %p99 = pneg %p98
      // Predicated region
      $region9: #{tpu_custom_call.1} parent=5 // pred_check
        _
      $region10: #{tpu_custom_call.1} parent=5 // pred_check_branch
        %101 = sbr.rel (%p98) target = $region12
      $region11: #{tpu_custom_call.1} parent=5 // pred_region
        %s102 = ssub.s32 %s15, 1
        // Predicated region
        $region13: #{tpu_custom_call.1} parent=11 // pred_check
          %p103 = pneg %p62
        $region14: #{tpu_custom_call.1} parent=11 // pred_check_branch
          %105 = sbr.rel (%p103) target = $region16
        $region15: #{tpu_custom_call.1} parent=11 // pred_region
          %s107 = ssub.s32 256, 256
          %108 = vsyncadd [#allocation6], %s107
          %s109 = sshll.u32 [#allocation5], 4
          %s110 = int_to_ptr.vmem [resolvable:$true] %s109
          %115 = dma.hbm_to_vmem [thread:$0]  %s1, 256, %s110, [#allocation6], 128, 128, 8
        $region16: #{tpu_custom_call.1} parent=11 // pred_fallthru
          _
      $region12: #{tpu_custom_call.1} parent=5 // pred_fallthru
        _
      %p116 = scmp.lt.s32.totalorder %s15, 3
      // Predicated region
      $region17: #{tpu_custom_call.1} parent=5 // pred_check
        %p117 = pneg %p116
      $region18: #{tpu_custom_call.1} parent=5 // pred_check_branch
        %119 = sbr.rel (%p117) target = $region20
      $region19: #{tpu_custom_call.1} parent=5 // pred_region
        // Predicated region
        $region21: #{tpu_custom_call.1} parent=19 // pred_check
          %p120 = pneg %p35
        $region22: #{tpu_custom_call.1} parent=19 // pred_check_branch
          %122 = sbr.rel (%p120) target = $region24
        $region23: #{tpu_custom_call.1} parent=19 // pred_region
          %s123 = sand.u32 %s25, 1
          %s124 = scalar_lea.sflag [#allocation3], %s123
          %s125 = sand.u32 %s25, 1
          %s126 = smul.addr %s125, 8
          %s127 = scalar_lea.vmem [#allocation2], %s126
          %s129 = ssub.s32 128, 128
          %130 = vsyncadd %s124, %s129
          %s131 = smul.addr %s15, 128
          %s132 = scalar_lea.hbm %s0, %s131
          %s134 = sshll.u32 %s127, 4
          %s135 = int_to_ptr.vmem [resolvable:$true] %s134
          %137 = dma.hbm_to_vmem [thread:$0]  %s132, 128, %s135, %s124
        $region24: #{tpu_custom_call.1} parent=19 // pred_fallthru
          _
      $region20: #{tpu_custom_call.1} parent=5 // pred_fallthru
        _
      %p138 = scmp.le.s32.totalorder 1, %s15
      %p139 = scmp.lt.s32.totalorder %s15, 4
      %p140 = pnand %p138, %p139
      %p141 = pneg %p140
      // Predicated region
      $region25: #{tpu_custom_call.1} parent=5 // pred_check
        _
      $region26: #{tpu_custom_call.1} parent=5 // pred_check_branch
        %143 = sbr.rel (%p140) target = $region28
      $region27: #{tpu_custom_call.1} parent=5 // pred_region
        %s144 = ssub.s32 %s15, 1
        %s145 = sand.u32 %s28, 1
        %s146 = scalar_lea.sflag [#allocation3], %s145
        %s147 = sand.u32 %s28, 1
        %s148 = smul.addr %s147, 8
        %s149 = scalar_lea.vmem [#allocation2], %s148
        // Predicated region
        $region29: #{tpu_custom_call.1} parent=27 // pred_check
          %p150 = pneg %p41
        $region30: #{tpu_custom_call.1} parent=27 // pred_check_branch
          %152 = sbr.rel (%p150) target = $region32
        $region31: #{tpu_custom_call.1} parent=27 // pred_region
          %153 = dma.done %s146, 128
        $region32: #{tpu_custom_call.1} parent=27 // pred_fallthru
          _
        // Predicated region
        $region33: #{tpu_custom_call.1} parent=27 // pred_check
          %p154 = pneg %p62
        $region34: #{tpu_custom_call.1} parent=27 // pred_check_branch
          %156 = sbr.rel (%p154) target = $region36
        $region35: #{tpu_custom_call.1} parent=27 // pred_region
          %157 = dma.done [#allocation6], 256
        $region36: #{tpu_custom_call.1} parent=27 // pred_fallthru
          _
        %s158 = sand.u32 %s28, 1
        %s159 = scalar_lea.sflag [#allocation3], %s158
        %s160 = sand.u32 %s28, 1
        %s161 = smul.addr %s160, 8
        %s162 = scalar_lea.vmem [#allocation2], %s161
        %p163 = pneg %p41
        %p164 = pneg %p38
        %p165 = pneg %p62
        %p166 = pneg %p59
        %p167 = pneg %p88
        %p168 = pneg %p85
        %s169 = sand.u32 %s75, 1
        %s170 = scalar_lea.sflag [#allocation4], %s169
        %s171 = sand.u32 %s75, 1
        %s172 = scalar_lea.vmem [#allocation7], %s171
        %v173 = vld [vmem:[%s149] sm:$0xff]
        %v174 = vld [vmem:[#allocation5] sm:$0xff]
        %v175 = vld [vmem:[#allocation5 + $0x8] sm:$0xff]
        %v176 = vmul.f32 %v173, %v173
        %vm177 = vcmask 261120
        %v178 = vsel %vm177, %v176, 0.0
        %179 = vadd.xlane.f32.xlu0 %v178
        %v180 = vpop.xlane.xlu0 %179
        %v181 = vmax.f32 %v180, 1e-24
        %v182 = vmul.f32 %v174, %v174
        %v183 = vmul.f32 %v175, %v175
        %v184 = vsel %vm177, %v182, 0.0
        %185 = vadd.xlane.f32.xlu0 %v184
        %v186 = vpop.xlane.xlu0 %185
        %v187 = vsel %vm177, %v183, 0.0
        %188 = vadd.xlane.f32.xlu0 %v187
        %v189 = vpop.xlane.xlu0 %188
        %v190 = vmax.f32 %v186, 1e-24
        %v191 = vmax.f32 %v189, 1e-24
        %v192 = vrsqrt.pop %v181
        %v193 = vmul.f32 %v173, %v192
        %v194 = vrsqrt.pop %v190
        %v195 = vrsqrt.pop %v191
        %v196 = vmul.f32 %v174, %v194
        %v197 = vmul.f32 %v175, %v195
        %v199 = vsel %vm177, %v193, 0
        %v202 = vsel %vm177, %v196, 0
        %v205 = vsel %vm177, %v197, 0
        %207 = vmatprep.subr.mxu0 0.0
        %208 = vmatpush1.xpose.msra.mxu0 %v202
        %209 = vmatprep.subr.mxu0 0.0
        %210 = vmatpush1.xpose.msra.mxu0 %v205
        %211 = vmatprep.subr.mxu0 0.0
        %212 = vmatpush1.xpose.msra.mxu0 0.0
        %213 = vmatprep.subr.mxu0 0.0
        %214 = vmatpush1.xpose.msra.mxu0 0.0
        %215 = vmatprep.subr.mxu0 0.0
        %216 = vmatpush1.xpose.msra.mxu0 0.0
        %217 = vmatprep.subr.mxu0 0.0
        %218 = vmatpush1.xpose.msra.mxu0 0.0
        %219 = vmatprep.subr.mxu0 0.0
        %220 = vmatpush1.xpose.msra.mxu0 0.0
        %221 = vmatprep.subr.mxu0 0.0
        %222 = vmatpush1.xpose.msra.mxu0 0.0
        %223 = vmatprep.subr.mxu0 0.0
        %224 = vmatpush1.xpose.msra.mxu0 0.0
        %225 = vmatprep.subr.mxu0 0.0
        %226 = vmatpush1.xpose.msra.mxu0 0.0
        %227 = vmatprep.subr.mxu0 0.0
        %228 = vmatpush1.xpose.msra.mxu0 0.0
        %229 = vmatprep.subr.mxu0 0.0
        %230 = vmatpush1.xpose.msra.mxu0 0.0
        %231 = vmatprep.subr.mxu0 0.0
        %232 = vmatpush1.xpose.msra.mxu0 0.0
        %233 = vmatprep.subr.mxu0 0.0
        %234 = vmatpush1.xpose.msra.mxu0 0.0
        %235 = vmatprep.subr.mxu0 0.0
        %236 = vmatpush1.xpose.msra.mxu0 0.0
        %237 = vmatprep.subr.mxu0 0.0
        %238 = vmatpush1.xpose.msra.mxu0 0.0
        %239 = vmatprep.subr.mxu0 0.0
        %240 = vmatpush1.xpose.msra.mxu0 0.0
        %241 = vmatprep.subr.mxu0 0.0
        %242 = vmatpush1.xpose.msra.mxu0 0.0
        %243 = vmatprep.subr.mxu0 0.0
        %244 = vmatpush1.xpose.msra.mxu0 0.0
        %245 = vmatprep.subr.mxu0 0.0
        %246 = vmatpush1.xpose.msra.mxu0 0.0
        %247 = vmatprep.subr.mxu0 0.0
        %248 = vmatpush1.xpose.msra.mxu0 0.0
        %249 = vmatprep.subr.mxu0 0.0
        %250 = vmatpush1.xpose.msra.mxu0 0.0
        %251 = vmatprep.subr.mxu0 0.0
        %252 = vmatpush1.xpose.msra.mxu0 0.0
        %253 = vmatprep.subr.mxu0 0.0
        %254 = vmatpush1.xpose.msra.mxu0 0.0
        %255 = vmatprep.subr.mxu0 0.0
        %256 = vmatpush1.xpose.msra.mxu0 0.0
        %257 = vmatprep.subr.mxu0 0.0
        %258 = vmatpush1.xpose.msra.mxu0 0.0
        %259 = vmatprep.subr.mxu0 0.0
        %260 = vmatpush1.xpose.msra.mxu0 0.0
        %261 = vmatprep.subr.mxu0 0.0
        %262 = vmatpush1.xpose.msra.mxu0 0.0
        %263 = vmatprep.subr.mxu0 0.0
        %264 = vmatpush1.xpose.msra.mxu0 0.0
        %265 = vmatprep.subr.mxu0 0.0
        %266 = vmatpush1.xpose.msra.mxu0 0.0
        %267 = vmatprep.subr.mxu0 0.0
        %268 = vmatpush1.xpose.msra.mxu0 0.0
        %269 = vmatprep.subr.mxu0 0.0
        %270 = vmatpush1.xpose.msra.mxu0 0.0
        %271 = vmatprep.mubr.f32.mxu0 0.0
        %272 = vmatmul.mubr.f32.gmra.mrb[0].mxu0 %v199
        %v273 = vpop.f32.mrb[0].mxu0
        %v274 = vadd.f32 0.0, %v273
        %v275 = vpop.f32.mrb[0].mxu0
        %276 = vdwg.mxu0
        %v277 = vmul.f32 %v274, 2.0
        %v278 = vsub.f32 2.0, %v277
        %v279 = vmax.f32 %v278, 0.0
        %v280 = vrsqrt.pop %v279
        %v281 = vmul.f32 %v279, %v280
        %vm282 = vcmp.eq.f32.partialorder %v279, inf
        %v283 = vsel %vm282, %v279, %v281
        %vm284 = vcmp.eq.f32.partialorder %v279, 0.0
        %v285 = vand.u32 %v279, 2147483648
        %v286 = vsel %vm284, %v285, %v283
        %v287 = vadd.f32 %v286, 1.0
        %v288 = vrcp.pop %v287
        %v289 = vmul.f32 1.0, %v288
        %v290 = vsub.f32 1.0, %v289
        %v291 = vmul.f32 %v289, 1.442695
        %v292 = vpow.pop %v291
        %v293 = vmul.f32 %v290, %v292
        %vm294 = vcmask 130048
        %v295 = vsel %vm294, %v293, 0.0
        %296 = vadd.xlane.f32.xlu0 %v295
        %v297 = vpop.xlane.xlu0 %296
        %v298 = vsel %vm294, %v292, 0.0
        %299 = vadd.xlane.f32.xlu0 %v298
        %v300 = vpop.xlane.xlu0 %299
        %v301 = vrcp.pop %v300
        %v302 = vmul.f32 %v297, %v301
        %s303 = smul.u32 %s20, 8
        %v304 = vlaneseq
        %v305 = vshrl.u32 %v304, 7
        %v306 = vstv %s303
        %v307 = vadd.s32 %v306, %v305
        %vm308 = vcmp.lt.s32.totalorder %v307, 20
        %v309 = vsel %vm308, %v302, 0.0
        %vm310 = vcmask 7168
        %v311 = vsel %vm310, %v309, 0.0
        %312 = vadd.xlane.f32.xlu0 %v311
        %v313 = vpop.xlane.xlu0 %312
        %v314 = vrot.slane %v313, 4
        %v315 = vadd.f32 %v313, %v314
        %v316 = vrot.slane %v315, 2
        %v317 = vadd.f32 %v315, %v316
        %v318 = vrot.slane %v317, 1
        %v319 = vadd.f32 %v317, %v318
        %s320 = vtos %v319
        %s321 = smul.f32 %s320, 0.05
        %v322 = vstv %s321
        %323 = vst [vmem:[%s172] sm:$0x1] %v322
        %s324 = sand.u32 %s75, 1
        %s325 = scalar_lea.sflag [#allocation4], %s324
        %s326 = sand.u32 %s75, 1
        %s327 = scalar_lea.vmem [#allocation7], %s326
        // Predicated region
        $region37: #{tpu_custom_call.1} parent=27 // pred_check
          %p328 = pneg %p85
        $region38: #{tpu_custom_call.1} parent=27 // pred_check_branch
          %330 = sbr.rel (%p328) target = $region40
        $region39: #{tpu_custom_call.1} parent=27 // pred_region
          %s332 = ssub.s32 16, 16
          %333 = vsyncadd %s325, %s332
          %s334 = smul.addr %s20, 16
          %s335 = scalar_lea.hbm %s2, %s334
          %s337 = sshll.u32 %s327, 4
          %s338 = int_to_ptr.vmem [resolvable:$true] %s337
          %340 = dma.vmem_to_hbm [thread:$0]  %s338, 16, %s335, %s325
        $region40: #{tpu_custom_call.1} parent=27 // pred_fallthru
          _
      $region28: #{tpu_custom_call.1} parent=5 // pred_fallthru
        _
      %p341 = scmp.le.s32.totalorder 2, %s15
      // Predicated region
      $region41: #{tpu_custom_call.1} parent=5 // pred_check
        %p342 = pneg %p341
      $region42: #{tpu_custom_call.1} parent=5 // pred_check_branch
        %344 = sbr.rel (%p342) target = $region44
      $region43: #{tpu_custom_call.1} parent=5 // pred_region
        %s345 = ssub.s32 %s15, 2
        // Predicated region
        $region45: #{tpu_custom_call.1} parent=43 // pred_check
          %p346 = pneg %p91
        $region46: #{tpu_custom_call.1} parent=43 // pred_check_branch
          %348 = sbr.rel (%p346) target = $region48
        $region47: #{tpu_custom_call.1} parent=43 // pred_region
          %s349 = sand.u32 %s76, 1
          %s350 = scalar_lea.sflag [#allocation4], %s349
          %s351 = sand.u32 %s76, 1
          %s352 = scalar_lea.vmem [#allocation7], %s351
          %353 = dma.done %s350, 16
        $region48: #{tpu_custom_call.1} parent=43 // pred_fallthru
          _
      $region44: #{tpu_custom_call.1} parent=5 // pred_fallthru
        _
    $region6: #{tpu_custom_call.1} parent=1 // loop_footer
      %s19 = sadd.s32 1, %s15
    $region7: #{tpu_custom_call.1} parent=1 // loop_footer_branch
      %14 = sbr.rel target = $region3
    $region8: #{tpu_custom_call.1} parent=1 // loop_exit
      _
    %354 = vsyncpa [#allocation3], 1
    %s355 = scalar_lea.sflag [#allocation3], 1
    %356 = vsyncpa %s355, 1
    %357 = vsyncpa [#allocation6], 1
    %358 = vsyncpa [#allocation4], 1
    %s359 = scalar_lea.sflag [#allocation4], 1
    %360 = vsyncpa %s359, 1

</llo_original>
